<compile_context>
chip_gen: v6e
topology: v6e:2x2x1
jax: 0.10.0
libtpu: 0.0.40
codegen_flags: <defaults>
</compile_context>

<pallas_src>
import jax
import jax.numpy as jnp
from jax.experimental import pallas as pl
from jax.experimental.pallas import tpu as pltpu


def _round_up(x: int, m: int) -> int:
    return ((x + m - 1) // m) * m


def ffn_kernel(x_ref, w1_ref, b1_ref, w2_ref, b2_ref, w3_ref, b3_ref,
               o_ref, acc_ref):
    # x_ref:   (tm, d_model)          tile of flattened tokens (resident over k)
    # w1_ref:  (d_model, tf)  b1_ref: (1, tf)      -- k-th d_ffn slice
    # w2_ref:  (d_model, tf)  b2_ref: (1, tf)
    # w3_ref:  (tf, d_model)  b3_ref: (1, d_model)
    # acc_ref: (tm, d_model) f32 accumulator for the third matmul
    k = pl.program_id(1)

    @pl.when(k == 0)
    def _init():
        acc_ref[...] = jnp.broadcast_to(
            b3_ref[...].astype(jnp.float32), acc_ref.shape)

    x = x_ref[...]  # keep input dtype -> bf16 inputs use the bf16 MXU path

    h1 = jnp.dot(x, w1_ref[...], preferred_element_type=jnp.float32)
    h1 = h1 + b1_ref[...].astype(jnp.float32)
    h2 = jnp.dot(x, w2_ref[...], preferred_element_type=jnp.float32)
    h2 = h2 + b2_ref[...].astype(jnp.float32)

    # SwiGLU gate in f32 (EUP handles the sigmoid; VPU does the muls).
    gated = (h1 * jax.nn.sigmoid(h1)) * h2

    acc_ref[...] += jnp.dot(gated.astype(w3_ref.dtype), w3_ref[...],
                            preferred_element_type=jnp.float32)

    @pl.when(k == pl.num_programs(1) - 1)
    def _finalize():
        o_ref[...] = acc_ref[...].astype(o_ref.dtype)


def ffn_forward(x, w1, b1, w2, b2, w3, b3, *,
                tm=256, tf=None, vmem_limit_bytes=64 << 20):
    """x: (B, S, d_model). Weights in PyTorch nn.Linear layout (out, in).

    tm / tf are upper bounds; the actual tiles are auto-sized so the
    double-buffered working set fits inside ~80% of `vmem_limit_bytes`
    (default 64 MiB -> safe on v5e/v6e/v7x).
    """
    B, S, d_model = x.shape
    d_ffn = w1.shape[0]
    M = B * S

    x_item = jnp.dtype(x.dtype).itemsize
    w_item = jnp.dtype(w1.dtype).itemsize

    def vmem_use(tm_, tf_):
        return (2 * tm_ * d_model * x_item            # x tile (double-buffered, conservative)
                + 2 * tm_ * d_model * x_item          # output tile
                + tm_ * d_model * 4                   # f32 accumulator scratch
                + 3 * 2 * d_model * tf_ * w_item      # W1/W2/W3 slices, double-buffered
                + 2 * (2 * tf_ + d_model) * w_item)   # bias slices

    budget = int(0.8 * vmem_limit_bytes)

    # Row tile: multiple of 8 sublanes, no larger than (padded) M.
    tm_eff = _round_up(min(tm, _round_up(M, 8)), 8)

    # d_ffn tile: lane-aligned (multiple of 128) unless d_ffn itself is tiny.
    if d_ffn < 128:
        tf_eff = d_ffn
        d_ffn_pad = d_ffn
    else:
        cap = tf if tf is not None else 2048
        cap = max(128, min((cap // 128) * 128, _round_up(d_ffn, 128)))
        cands = [t for t in range(cap, 127, -128) if vmem_use(tm_eff, t) <= budget]
        if not cands:
            cands = [128]
        # Minimize wasted (padded) d_ffn work; tie-break on the largest tile.
        tf_eff = min(cands, key=lambda t: (_round_up(d_ffn, t), -t))
        d_ffn_pad = _round_up(d_ffn, tf_eff)

    # If still over budget (huge d_model), shrink the row tile.
    while tm_eff > 8 and vmem_use(tm_eff, tf_eff) > budget:
        tm_eff = _round_up(max(8, tm_eff // 2), 8)

    M_pad = _round_up(M, tm_eff)
    nk = d_ffn_pad // tf_eff

    x2 = x.reshape(M, d_model)
    if M_pad != M:
        x2 = jnp.pad(x2, ((0, M_pad - M), (0, 0)))

    # Pre-transpose to (in, out) so the kernel does plain x @ W on the MXU.
    w1t = jnp.transpose(w1)            # (d_model, d_ffn)
    w2t = jnp.transpose(w2)            # (d_model, d_ffn)
    w3t = jnp.transpose(w3)            # (d_ffn, d_model)
    b1r = b1.reshape(1, d_ffn)
    b2r = b2.reshape(1, d_ffn)
    b3r = b3.reshape(1, d_model)

    # Zero-pad d_ffn: padded columns give h1 = 0 => silu(0)*h2 = 0 => no effect.
    if d_ffn_pad != d_ffn:
        pad_f = d_ffn_pad - d_ffn
        w1t = jnp.pad(w1t, ((0, 0), (0, pad_f)))
        w2t = jnp.pad(w2t, ((0, 0), (0, pad_f)))
        b1r = jnp.pad(b1r, ((0, 0), (0, pad_f)))
        b2r = jnp.pad(b2r, ((0, 0), (0, pad_f)))
        w3t = jnp.pad(w3t, ((0, pad_f), (0, 0)))

    grid = (M_pad // tm_eff, nk)

    out2 = pl.pallas_call(
        ffn_kernel,
        out_shape=jax.ShapeDtypeStruct((M_pad, d_model), x.dtype),
        grid_spec=pltpu.PrefetchScalarGridSpec(
            num_scalar_prefetch=0,
            grid=grid,
            in_specs=[
                pl.BlockSpec((tm_eff, d_model), lambda i, k: (i, 0)),   # x rows
                pl.BlockSpec((d_model, tf_eff), lambda i, k: (0, k)),   # W1^T slice
                pl.BlockSpec((1, tf_eff),       lambda i, k: (0, k)),   # b1 slice
                pl.BlockSpec((d_model, tf_eff), lambda i, k: (0, k)),   # W2^T slice
                pl.BlockSpec((1, tf_eff),       lambda i, k: (0, k)),   # b2 slice
                pl.BlockSpec((tf_eff, d_model), lambda i, k: (k, 0)),   # W3^T slice
                pl.BlockSpec((1, d_model),      lambda i, k: (0, 0)),   # b3
            ],
            out_specs=pl.BlockSpec((tm_eff, d_model), lambda i, k: (i, 0)),
            scratch_shapes=[pltpu.VMEM((tm_eff, d_model), jnp.float32)],
        ),
        compiler_params=pltpu.CompilerParams(
            dimension_semantics=("parallel", "arbitrary"),
            vmem_limit_bytes=vmem_limit_bytes,
        ),
    )(x2, w1t, b1r, w2t, b2r, w3t, b3r)

    return out2[:M].reshape(B, S, d_model)


def ffn_reference(x, w1, b1, w2, b2, w3, b3):
    h1 = jnp.einsum("bsd,fd->bsf", x, w1) + b1
    h2 = jnp.einsum("bsd,fd->bsf", x, w2) + b2
    g = (h1 * jax.nn.sigmoid(h1)) * h2
    return jnp.einsum("bsf,df->bsd", g, w3) + b3


def _make_params(key, d_model, d_ffn, dtype=jnp.float32):
    k1, k2, k3, k4, k5, k6 = jax.random.split(key, 6)
    s1 = 1.0 / (d_model ** 0.5)
    s3 = 1.0 / (d_ffn ** 0.5)
    w1 = jax.random.uniform(k1, (d_ffn, d_model), dtype, -s1, s1)
    b1 = jax.random.uniform(k2, (d_ffn,), dtype, -s1, s1)
    w2 = jax.random.uniform(k3, (d_ffn, d_model), dtype, -s1, s1)
    b2 = jax.random.uniform(k4, (d_ffn,), dtype, -s1, s1)
    w3 = jax.random.uniform(k5, (d_model, d_ffn), dtype, -s3, s3)
    b3 = jax.random.uniform(k6, (d_model,), dtype, -s3, s3)
    return w1, b1, w2, b2, w3, b3


if __name__ == "__main__":
    key = jax.random.PRNGKey(0)
    batch, seq = 2, 8

    # --- Test 1: toy module config (lane-underfilled; single k step). ---
    d_model, d_ffn = 32, 64
    kx, kp, krest = jax.random.split(key, 3)
    x = jax.random.normal(kx, (batch, seq, d_model), dtype=jnp.float32)
    params = _make_params(kp, d_model, d_ffn)
    out = jax.block_until_ready(ffn_forward(x, *params))
    ref = ffn_reference(x, *params)
    assert out.shape == (batch, seq, d_model)
    assert jnp.allclose(out, ref, atol=1e-3, rtol=1e-3), "mismatch vs reference (test 1)"

    # --- Test 2: lane-dense shapes, 2 k-steps over d_ffn (accumulator path). ---
    d_model2, d_ffn2 = 128, 256
    kx2, kp2, krest = jax.random.split(krest, 3)
    x2 = jax.random.normal(kx2, (batch, seq, d_model2), dtype=jnp.float32)
    params2 = _make_params(kp2, d_model2, d_ffn2)
    out2 = jax.block_until_ready(ffn_forward(x2, *params2, tf=128))
    ref2 = ffn_reference(x2, *params2)
    assert out2.shape == (batch, seq, d_model2)
    assert jnp.allclose(out2, ref2, atol=1e-3, rtol=1e-3), "mismatch vs reference (test 2)"

    # --- Test 3: d_ffn = int(8*d_model/3) (not a multiple of 128) exercises the
    #             zero-padded d_ffn reduction path. ---
    d_model3 = 128
    d_ffn3 = int(8 * d_model3 / 3)   # 341
    kx3, kp3, krest = jax.random.split(krest, 3)
    x3 = jax.random.normal(kx3, (batch, seq, d_model3), dtype=jnp.float32)
    params3 = _make_params(kp3, d_model3, d_ffn3)
    out3 = jax.block_until_ready(ffn_forward(x3, *params3, tf=128))
    ref3 = ffn_reference(x3, *params3)
    assert out3.shape == (batch, seq, d_model3)
    assert jnp.allclose(out3, ref3, atol=1e-3, rtol=1e-3), "mismatch vs reference (test 3)"

    # --- Test 4: bf16 inputs/weights (bf16 MXU path, f32 accumulation). ---
    xb = x2.astype(jnp.bfloat16)
    pb = tuple(p.astype(jnp.bfloat16) for p in params2)
    outb = jax.block_until_ready(ffn_forward(xb, *pb, tf=128))
    refb = ffn_reference(*(a.astype(jnp.float32) for a in (xb,) + pb))
    assert jnp.allclose(outb.astype(jnp.float32), refb, atol=5e-2, rtol=5e-2), \
        "mismatch vs reference (test 4, bf16)"

    print("KERNEL_OK")
</pallas_src>

<mosaic_0001>
module attributes {stable_mosaic.version = 11 : i64} {
  func.func @ffn_kernel(%arg0: i32, %arg1: i32, %arg2: memref<16x32xf32, #tpu.memory_space<vmem>>, %arg3: memref<32x64xf32, #tpu.memory_space<vmem>>, %arg4: memref<1x64xf32, #tpu.memory_space<vmem>>, %arg5: memref<32x64xf32, #tpu.memory_space<vmem>>, %arg6: memref<1x64xf32, #tpu.memory_space<vmem>>, %arg7: memref<64x32xf32, #tpu.memory_space<vmem>>, %arg8: memref<1x32xf32, #tpu.memory_space<vmem>>, %arg9: memref<16x32xf32, #tpu.memory_space<vmem>>, %arg10: memref<16x32xf32, #tpu.memory_space<vmem>>) attributes {dimension_semantics = [#tpu.dimension_semantics<parallel>, #tpu.dimension_semantics<arbitrary>], iteration_bounds = array<i64: 1, 1>, scalar_prefetch = 0 : i64, scratch_operands = 1 : i64, tpu.core_type = #tpu.core_type<tc>, window_params = [{transform_indices = @transform_0, window_bounds = array<i64: 16, 32>}, {transform_indices = @transform_1, window_bounds = array<i64: 32, 64>}, {transform_indices = @transform_2, window_bounds = array<i64: 1, 64>}, {transform_indices = @transform_3, window_bounds = array<i64: 32, 64>}, {transform_indices = @transform_4, window_bounds = array<i64: 1, 64>}, {transform_indices = @transform_5, window_bounds = array<i64: 64, 32>}, {pipeline_mode = #tpu.pipeline_mode<synchronous>, transform_indices = @transform_6, window_bounds = array<i64: 1, 32>}, {transform_indices = @transform_7, window_bounds = array<i64: 16, 32>}]} {
    %c0_i32 = arith.constant 0 : i32
    %0 = arith.cmpi eq, %arg1, %c0_i32 : i32
    %1 = arith.extui %0 : i1 to i32
    %c0_i32_0 = arith.constant 0 : i32
    %2 = arith.cmpi ne, %1, %c0_i32_0 : i32
    scf.if %2 {
      %c0_21 = arith.constant 0 : index
      %c0_22 = arith.constant 0 : index
      %29 = vector.load %arg8[%c0_21, %c0_22] : memref<1x32xf32, #tpu.memory_space<vmem>>, vector<1x32xf32>
      %30 = vector.shape_cast %29 : vector<1x32xf32> to vector<1x32xf32>
      %31 = vector.broadcast %30 : vector<1x32xf32> to vector<16x32xf32>
      %c0_23 = arith.constant 0 : index
      %c0_24 = arith.constant 0 : index
      %32 = vector.load %arg10[%c0_23, %c0_24] : memref<16x32xf32, #tpu.memory_space<vmem>>, vector<16x32xf32>
      tpu.vector_store %arg10[%c0_23, %c0_24], %31 {strides = array<i32>} : memref<16x32xf32, #tpu.memory_space<vmem>>, vector<16x32xf32>,
    } else {
    }
    %c0 = arith.constant 0 : index
    %c0_1 = arith.constant 0 : index
    %3 = vector.load %arg2[%c0, %c0_1] : memref<16x32xf32, #tpu.memory_space<vmem>>, vector<16x32xf32>
    %c0_2 = arith.constant 0 : index
    %c0_3 = arith.constant 0 : index
    %4 = vector.load %arg3[%c0_2, %c0_3] : memref<32x64xf32, #tpu.memory_space<vmem>>, vector<32x64xf32>
    %cst = arith.constant dense<0.000000e+00> : vector<16x64xf32>
    %5 = tpu.matmul %3, %4, %cst {dimension_numbers = #tpu.dot_dimension_numbers<[1], [0], [0], [1], [0, 0, 1, 1], [], []>} : vector<16x32xf32>, vector<32x64xf32>, vector<16x64xf32> -> vector<16x64xf32>
    %c0_4 = arith.constant 0 : index
    %c0_5 = arith.constant 0 : index
    %6 = vector.load %arg4[%c0_4, %c0_5] : memref<1x64xf32, #tpu.memory_space<vmem>>, vector<1x64xf32>
    %7 = vector.broadcast %6 : vector<1x64xf32> to vector<16x64xf32>
    %8 = arith.addf %5, %7 : vector<16x64xf32>
    %c0_6 = arith.constant 0 : index
    %c0_7 = arith.constant 0 : index
    %9 = vector.load %arg5[%c0_6, %c0_7] : memref<32x64xf32, #tpu.memory_space<vmem>>, vector<32x64xf32>
    %cst_8 = arith.constant dense<0.000000e+00> : vector<16x64xf32>
    %10 = tpu.matmul %3, %9, %cst_8 {dimension_numbers = #tpu.dot_dimension_numbers<[1], [0], [0], [1], [0, 0, 1, 1], [], []>} : vector<16x32xf32>, vector<32x64xf32>, vector<16x64xf32> -> vector<16x64xf32>
    %c0_9 = arith.constant 0 : index
    %c0_10 = arith.constant 0 : index
    %11 = vector.load %arg6[%c0_9, %c0_10] : memref<1x64xf32, #tpu.memory_space<vmem>>, vector<1x64xf32>
    %12 = vector.broadcast %11 : vector<1x64xf32> to vector<16x64xf32>
    %13 = arith.addf %10, %12 : vector<16x64xf32>
    %14 = arith.negf %8 : vector<16x64xf32>
    %15 = math.exp %14 : vector<16x64xf32>
    %cst_11 = arith.constant 1.000000e+00 : f32
    %16 = vector.broadcast %cst_11 : f32 to vector<16x64xf32>
    %17 = arith.addf %16, %15 : vector<16x64xf32>
    %18 = arith.divf %16, %17 : vector<16x64xf32>
    %19 = arith.mulf %8, %18 : vector<16x64xf32>
    %20 = arith.mulf %19, %13 : vector<16x64xf32>
    %c0_12 = arith.constant 0 : index
    %c0_13 = arith.constant 0 : index
    %21 = vector.load %arg10[%c0_12, %c0_13] : memref<16x32xf32, #tpu.memory_space<vmem>>, vector<16x32xf32>
    %c0_14 = arith.constant 0 : index
    %c0_15 = arith.constant 0 : index
    %22 = vector.load %arg7[%c0_14, %c0_15] : memref<64x32xf32, #tpu.memory_space<vmem>>, vector<64x32xf32>
    %cst_16 = arith.constant dense<0.000000e+00> : vector<16x32xf32>
    %23 = tpu.matmul %20, %22, %cst_16 {dimension_numbers = #tpu.dot_dimension_numbers<[1], [0], [0], [1], [0, 0, 1, 1], [], []>} : vector<16x64xf32>, vector<64x32xf32>, vector<16x32xf32> -> vector<16x32xf32>
    %24 = arith.addf %21, %23 : vector<16x32xf32>
    %c0_17 = arith.constant 0 : index
    %c0_18 = arith.constant 0 : index
    %25 = vector.load %arg10[%c0_17, %c0_18] : memref<16x32xf32, #tpu.memory_space<vmem>>, vector<16x32xf32>
    tpu.vector_store %arg10[%c0_17, %c0_18], %24 {strides = array<i32>} : memref<16x32xf32, #tpu.memory_space<vmem>>, vector<16x32xf32>,
    %c0_i32_19 = arith.constant 0 : i32
    %26 = arith.cmpi eq, %arg1, %c0_i32_19 : i32
    %27 = arith.extui %26 : i1 to i32
    %c0_i32_20 = arith.constant 0 : i32
    %28 = arith.cmpi ne, %27, %c0_i32_20 : i32
    scf.if %28 {
      %c0_21 = arith.constant 0 : index
      %c0_22 = arith.constant 0 : index
      %29 = vector.load %arg10[%c0_21, %c0_22] : memref<16x32xf32, #tpu.memory_space<vmem>>, vector<16x32xf32>
      %c0_23 = arith.constant 0 : index
      %c0_24 = arith.constant 0 : index
      %30 = vector.load %arg9[%c0_23, %c0_24] : memref<16x32xf32, #tpu.memory_space<vmem>>, vector<16x32xf32>
      tpu.vector_store %arg9[%c0_23, %c0_24], %29 {strides = array<i32>} : memref<16x32xf32, #tpu.memory_space<vmem>>, vector<16x32xf32>,
    } else {
    }
    return
  }
  func.func @transform_0(%arg0: i32, %arg1: i32) -> (i32, i32) {
    %c0_i32 = arith.constant 0 : i32
    %c0_i32_0 = arith.constant 0 : i32
    return %arg0, %c0_i32 : i32, i32
  }
  func.func @transform_1(%arg0: i32, %arg1: i32) -> (i32, i32) {
    %c0_i32 = arith.constant 0 : i32
    %c0_i32_0 = arith.constant 0 : i32
    return %c0_i32, %arg1 : i32, i32
  }
  func.func @transform_2(%arg0: i32, %arg1: i32) -> (i32, i32) {
    %c0_i32 = arith.constant 0 : i32
    %c0_i32_0 = arith.constant 0 : i32
    return %c0_i32, %arg1 : i32, i32
  }
  func.func @transform_3(%arg0: i32, %arg1: i32) -> (i32, i32) {
    %c0_i32 = arith.constant 0 : i32
    %c0_i32_0 = arith.constant 0 : i32
    return %c0_i32, %arg1 : i32, i32
  }
  func.func @transform_4(%arg0: i32, %arg1: i32) -> (i32, i32) {
    %c0_i32 = arith.constant 0 : i32
    %c0_i32_0 = arith.constant 0 : i32
    return %c0_i32, %arg1 : i32, i32
  }
  func.func @transform_5(%arg0: i32, %arg1: i32) -> (i32, i32) {
    %c0_i32 = arith.constant 0 : i32
    %c0_i32_0 = arith.constant 0 : i32
    return %arg1, %c0_i32 : i32, i32
  }
  func.func @transform_6(%arg0: i32, %arg1: i32) -> (i32, i32) {
    %c0_i32 = arith.constant 0 : i32
    %c0_i32_0 = arith.constant 0 : i32
    %c0_i32_1 = arith.constant 0 : i32
    return %c0_i32, %c0_i32_0 : i32, i32
  }
  func.func @transform_7(%arg0: i32, %arg1: i32) -> (i32, i32) {
    %c0_i32 = arith.constant 0 : i32
    %c0_i32_0 = arith.constant 0 : i32
    return %arg0, %c0_i32 : i32, i32
  }
}

</mosaic_0001>

<llo_original>
// kernel: tpu_custom_call.1
$region0: #{tpu_custom_call.1}
  #allocation0 [shape = 'u32[]', space=smem, size = 0x4, offset = 0x4, fixed_abs, tag = 'smem constant byte address 0x4 - core index']
  #allocation1 [shape = 'u32[144,128]{1,0:T(1,128)}', space=vmem, size = 0x12000, scoped, tag = 'internal scratch']
  #allocation2 [shape = 'f32[16,32]{1,0:T(8,128)}', space=vmem, size = 0x2000, scoped, tag = 'scratch operand']
  %s0 = inlined_call_operand.vmem [shape: f32[16,32], index: 0, kind: input, shape index: {}]
  %s1 = inlined_call_operand.vmem [shape: f32[32,64], index: 1, kind: input, shape index: {}]
  %s2 = inlined_call_operand.vmem [shape: f32[1,64], index: 2, kind: input, shape index: {}]
  %s3 = inlined_call_operand.vmem [shape: f32[32,64], index: 3, kind: input, shape index: {}]
  %s4 = inlined_call_operand.vmem [shape: f32[1,64], index: 4, kind: input, shape index: {}]
  %s5 = inlined_call_operand.vmem [shape: f32[64,32], index: 5, kind: input, shape index: {}]
  %s6 = inlined_call_operand.vmem [shape: f32[1,32], index: 6, kind: input, shape index: {}]
  %s7 = inlined_call_operand.hbm [shape: f32[16,32], index: 7, kind: output, shape index: {}]
  %s8 = sld [smem:[#allocation0]]
  $region46: #{tpu_custom_call.1} parent=0
    _
  %s10 = ssub.s32 1, %s8
  %s11 = scalar_select 0, %s10, %s8
  $region1: #{tpu_custom_call.1} parent=0
    #allocation3 [shape = 'u8[8192]{0}', space=vmem, size = 0x2000, scoped, tag = 'output window, operand 0, single buffered']
    #allocation4 [shape = 's32[1]{0}', space=sflag, size = 0x4, scoped, tag = 'scoped memory for tpu_custom_call.1']
    %12 = vsyncpa [#allocation4], 0
    // Predicated region
    $region2: #{tpu_custom_call.1} parent=1 // pred_check
      _
    $region3: #{tpu_custom_call.1} parent=1 // pred_check_branch
      %14 = sbr.rel (0) target = $region5
    $region4: #{tpu_custom_call.1} parent=1 // pred_region
      _
    $region5: #{tpu_custom_call.1} parent=1 // pred_fallthru
      _
    // Predicated region
    $region6: #{tpu_custom_call.1} parent=1 // pred_check
      _
    $region7: #{tpu_custom_call.1} parent=1 // pred_check_branch
      %16 = sbr.rel (0) target = $region9
    $region8: #{tpu_custom_call.1} parent=1 // pred_region
      _
    $region9: #{tpu_custom_call.1} parent=1 // pred_fallthru
      _
    // Predicated region
    $region10: #{tpu_custom_call.1} parent=1 // pred_check
      _
    $region11: #{tpu_custom_call.1} parent=1 // pred_check_branch
      %18 = sbr.rel (0) target = $region13
    $region12: #{tpu_custom_call.1} parent=1 // pred_region
      _
    $region13: #{tpu_custom_call.1} parent=1 // pred_fallthru
      _
    // Predicated region
    $region14: #{tpu_custom_call.1} parent=1 // pred_check
      _
    $region15: #{tpu_custom_call.1} parent=1 // pred_check_branch
      %20 = sbr.rel (0) target = $region17
    $region16: #{tpu_custom_call.1} parent=1 // pred_region
      _
    $region17: #{tpu_custom_call.1} parent=1 // pred_fallthru
      _
    // Predicated region
    $region18: #{tpu_custom_call.1} parent=1 // pred_check
      _
    $region19: #{tpu_custom_call.1} parent=1 // pred_check_branch
      %22 = sbr.rel (0) target = $region21
    $region20: #{tpu_custom_call.1} parent=1 // pred_region
      _
    $region21: #{tpu_custom_call.1} parent=1 // pred_fallthru
      _
    // Predicated region
    $region22: #{tpu_custom_call.1} parent=1 // pred_check
      _
    $region23: #{tpu_custom_call.1} parent=1 // pred_check_branch
      %24 = sbr.rel (0) target = $region25
    $region24: #{tpu_custom_call.1} parent=1 // pred_region
      _
    $region25: #{tpu_custom_call.1} parent=1 // pred_fallthru
      _
    // Predicated region
    $region26: #{tpu_custom_call.1} parent=1 // pred_check
      _
    $region27: #{tpu_custom_call.1} parent=1 // pred_check_branch
      %26 = sbr.rel (0) target = $region29
    $region28: #{tpu_custom_call.1} parent=1 // pred_region
      _
    $region29: #{tpu_custom_call.1} parent=1 // pred_fallthru
      _
    %p27 = scmp.eq.s32.totalorder 0, 0
    // Predicated region
    $region30: #{tpu_custom_call.1} parent=1 // pred_check
      %p28 = pneg %p27
    $region31: #{tpu_custom_call.1} parent=1 // pred_check_branch
      %30 = sbr.rel (%p28) target = $region33
    $region32: #{tpu_custom_call.1} parent=1 // pred_region
      %v31 = vld [vmem:[%s6] sm:$0x1]
      %v33 = vlaneseq
      %v34 = vshrl.u32 %v33, 7
      %v35 = vsub.s32 0, %v34
      %v36 = vrot.slane %v31, %v35
      %vm38 = vcmask 261120
      %39 = vst.msk [vmem:[#allocation2] sm:$0xff] %vm38, %v36
      %40 = vst.msk [vmem:[#allocation2 + $0x8] sm:$0xff] %vm38, %v36
    $region33: #{tpu_custom_call.1} parent=1 // pred_fallthru
      _
    %v41 = vld [vmem:[%s0] sm:$0xff]
    %v42 = vld [vmem:[%s0 + $0x8] sm:$0xff]
    %v43 = vld [vmem:[%s1] sm:$0xff]
    %v44 = vld [vmem:[%s1 + $0x8] sm:$0xff]
    %v45 = vld [vmem:[%s1 + $0x10] sm:$0xff]
    %v46 = vld [vmem:[%s1 + $0x18] sm:$0xff]
    %v47 = vld [vmem:[%s2] sm:$0x1]
    %v49 = vlaneseq
    %v50 = vshrl.u32 %v49, 7
    %v51 = vsub.s32 0, %v50
    %v52 = vrot.slane %v47, %v51
    %vm54 = vcmask 261120
    %v56 = vsel %vm54, %v41, 0
    %v59 = vsel %vm54, %v42, 0
    %61 = vmatprep.subr.mxu0 0.0
    %62 = vmatpush1.msra.mxu0 0.0
    %63 = vmatprep.subr.mxu0 0.0
    %64 = vmatpush1.msra.mxu0 0.0
    %65 = vmatprep.subr.mxu0 0.0
    %66 = vmatpush1.msra.mxu0 0.0
    %67 = vmatprep.subr.mxu0 0.0
    %68 = vmatpush1.msra.mxu0 0.0
    %69 = vmatprep.subr.mxu0 0.0
    %70 = vmatpush1.msra.mxu0 0.0
    %71 = vmatprep.subr.mxu0 0.0
    %72 = vmatpush1.msra.mxu0 0.0
    %73 = vmatprep.subr.mxu0 0.0
    %74 = vmatpush1.msra.mxu0 0.0
    %75 = vmatprep.subr.mxu0 0.0
    %76 = vmatpush1.msra.mxu0 0.0
    %77 = vmatprep.subr.mxu0 0.0
    %78 = vmatpush1.msra.mxu0 0.0
    %79 = vmatprep.subr.mxu0 0.0
    %80 = vmatpush1.msra.mxu0 0.0
    %81 = vmatprep.subr.mxu0 0.0
    %82 = vmatpush1.msra.mxu0 0.0
    %83 = vmatprep.subr.mxu0 0.0
    %84 = vmatpush1.msra.mxu0 0.0
    %85 = vmatprep.subr.mxu0 0.0
    %86 = vmatpush1.msra.mxu0 %v46
    %87 = vmatprep.subr.mxu0 0.0
    %88 = vmatpush1.msra.mxu0 %v45
    %89 = vmatprep.subr.mxu0 0.0
    %90 = vmatpush1.msra.mxu0 %v44
    %91 = vmatprep.subr.mxu0 0.0
    %92 = vmatpush1.msra.mxu0 %v43
    %93 = vmatprep.subr.mxu0 0.0
    %94 = vmatpush2.msra.mxu0 0.0
    %95 = vmatprep.subr.mxu0 0.0
    %96 = vmatpush2.msra.mxu0 0.0
    %97 = vmatprep.subr.mxu0 0.0
    %98 = vmatpush2.msra.mxu0 0.0
    %99 = vmatprep.subr.mxu0 0.0
    %100 = vmatpush2.msra.mxu0 0.0
    %101 = vmatprep.subr.mxu0 0.0
    %102 = vmatpush2.msra.mxu0 0.0
    %103 = vmatprep.subr.mxu0 0.0
    %104 = vmatpush2.msra.mxu0 0.0
    %105 = vmatprep.subr.mxu0 0.0
    %106 = vmatpush2.msra.mxu0 0.0
    %107 = vmatprep.subr.mxu0 0.0
    %108 = vmatpush2.msra.mxu0 0.0
    %109 = vmatprep.subr.mxu0 0.0
    %110 = vmatpush2.msra.mxu0 0.0
    %111 = vmatprep.subr.mxu0 0.0
    %112 = vmatpush2.msra.mxu0 0.0
    %113 = vmatprep.subr.mxu0 0.0
    %114 = vmatpush2.msra.mxu0 0.0
    %115 = vmatprep.subr.mxu0 0.0
    %116 = vmatpush2.msra.mxu0 0.0
    %117 = vmatprep.subr.mxu0 0.0
    %118 = vmatpush2.msra.mxu0 0.0
    %119 = vmatprep.subr.mxu0 0.0
    %120 = vmatpush2.msra.mxu0 0.0
    %121 = vmatprep.subr.mxu0 0.0
    %122 = vmatpush2.msra.mxu0 0.0
    %123 = vmatprep.subr.mxu0 0.0
    %124 = vmatpush2.msra.mxu0 0.0
    %125 = vmatprep.mubr.f32.mxu0 0.0
    %126 = vmatmul.mubr.f32.gmra.mxu0 %v56
    %v127 = vpop.f32.mrf.mxu0
    %v128 = vadd.f32 %v52, %v127
    %v129 = vpop.f32.mrf.mxu0
    %130 = vmatprep.mubr.f32.mxu0 0.0
    %131 = vmatmul.mubr.f32.gmra.mxu0 %v59
    %v132 = vpop.f32.mrf.mxu0
    %v133 = vadd.f32 %v52, %v132
    %v134 = vpop.f32.mrf.mxu0
    %135 = vdwg.mxu0
    %v136 = vld [vmem:[%s3] sm:$0xff]
    %v137 = vld [vmem:[%s3 + $0x8] sm:$0xff]
    %v138 = vld [vmem:[%s3 + $0x10] sm:$0xff]
    %v139 = vld [vmem:[%s3 + $0x18] sm:$0xff]
    %v140 = vld [vmem:[%s4] sm:$0x1]
    %v142 = vlaneseq
    %v143 = vshrl.u32 %v142, 7
    %v144 = vsub.s32 0, %v143
    %v145 = vrot.slane %v140, %v144
    %147 = vmatprep.subr.mxu0 0.0
    %148 = vmatpush1.msra.mxu0 0.0
    %149 = vmatprep.subr.mxu0 0.0
    %150 = vmatpush1.msra.mxu0 0.0
    %151 = vmatprep.subr.mxu0 0.0
    %152 = vmatpush1.msra.mxu0 0.0
    %153 = vmatprep.subr.mxu0 0.0
    %154 = vmatpush1.msra.mxu0 0.0
    %155 = vmatprep.subr.mxu0 0.0
    %156 = vmatpush1.msra.mxu0 0.0
    %157 = vmatprep.subr.mxu0 0.0
    %158 = vmatpush1.msra.mxu0 0.0
    %159 = vmatprep.subr.mxu0 0.0
    %160 = vmatpush1.msra.mxu0 0.0
    %161 = vmatprep.subr.mxu0 0.0
    %162 = vmatpush1.msra.mxu0 0.0
    %163 = vmatprep.subr.mxu0 0.0
    %164 = vmatpush1.msra.mxu0 0.0
    %165 = vmatprep.subr.mxu0 0.0
    %166 = vmatpush1.msra.mxu0 0.0
    %167 = vmatprep.subr.mxu0 0.0
    %168 = vmatpush1.msra.mxu0 0.0
    %169 = vmatprep.subr.mxu0 0.0
    %170 = vmatpush1.msra.mxu0 0.0
    %171 = vmatprep.subr.mxu0 0.0
    %172 = vmatpush1.msra.mxu0 %v139
    %173 = vmatprep.subr.mxu0 0.0
    %174 = vmatpush1.msra.mxu0 %v138
    %175 = vmatprep.subr.mxu0 0.0
    %176 = vmatpush1.msra.mxu0 %v137
    %177 = vmatprep.subr.mxu0 0.0
    %178 = vmatpush1.msra.mxu0 %v136
    %179 = vmatprep.subr.mxu0 0.0
    %180 = vmatpush2.msra.mxu0 0.0
    %181 = vmatprep.subr.mxu0 0.0
    %182 = vmatpush2.msra.mxu0 0.0
    %183 = vmatprep.subr.mxu0 0.0
    %184 = vmatpush2.msra.mxu0 0.0
    %185 = vmatprep.subr.mxu0 0.0
    %186 = vmatpush2.msra.mxu0 0.0
    %187 = vmatprep.subr.mxu0 0.0
    %188 = vmatpush2.msra.mxu0 0.0
    %189 = vmatprep.subr.mxu0 0.0
    %190 = vmatpush2.msra.mxu0 0.0
    %191 = vmatprep.subr.mxu0 0.0
    %192 = vmatpush2.msra.mxu0 0.0
    %193 = vmatprep.subr.mxu0 0.0
    %194 = vmatpush2.msra.mxu0 0.0
    %195 = vmatprep.subr.mxu0 0.0
    %196 = vmatpush2.msra.mxu0 0.0
    %197 = vmatprep.subr.mxu0 0.0
    %198 = vmatpush2.msra.mxu0 0.0
    %199 = vmatprep.subr.mxu0 0.0
    %200 = vmatpush2.msra.mxu0 0.0
    %201 = vmatprep.subr.mxu0 0.0
    %202 = vmatpush2.msra.mxu0 0.0
    %203 = vmatprep.subr.mxu0 0.0
    %204 = vmatpush2.msra.mxu0 0.0
    %205 = vmatprep.subr.mxu0 0.0
    %206 = vmatpush2.msra.mxu0 0.0
    %207 = vmatprep.subr.mxu0 0.0
    %208 = vmatpush2.msra.mxu0 0.0
    %209 = vmatprep.subr.mxu0 0.0
    %210 = vmatpush2.msra.mxu0 0.0
    %211 = vmatprep.mubr.f32.mxu0 0.0
    %212 = vmatmul.mubr.f32.gmra.mxu0 %v56
    %v213 = vpop.f32.mrf.mxu0
    %v214 = vadd.f32 %v145, %v213
    %v215 = vpop.f32.mrf.mxu0
    %216 = vmatprep.mubr.f32.mxu0 0.0
    %217 = vmatmul.mubr.f32.gmra.mxu0 %v59
    %v218 = vpop.f32.mrf.mxu0
    %v219 = vadd.f32 %v145, %v218
    %v220 = vpop.f32.mrf.mxu0
    %221 = vdwg.mxu0
    %v222 = vxor.u32 %v128, 2147483648
    %v223 = vxor.u32 %v133, 2147483648
    %v224 = vmul.f32 %v222, 1.442695
    %v225 = vpow.pop %v224
    %v226 = vmul.f32 %v223, 1.442695
    %v227 = vpow.pop %v226
    %v228 = vadd.f32 %v225, 1.0
    %v229 = vadd.f32 %v227, 1.0
    %v230 = vrcp.pop %v228
    %v231 = vmul.f32 1.0, %v230
    %v232 = vrcp.pop %v229
    %v233 = vmul.f32 1.0, %v232
    %v234 = vmul.f32 %v128, %v231
    %v235 = vmul.f32 %v133, %v233
    %v236 = vmul.f32 %v234, %v214
    %v237 = vmul.f32 %v235, %v219
    %v238 = vld [vmem:[#allocation2] sm:$0xff]
    %v239 = vld [vmem:[#allocation2 + $0x8] sm:$0xff]
    %v240 = vld [vmem:[%s5] sm:$0xff]
    %v241 = vld [vmem:[%s5 + $0x8] sm:$0xff]
    %v242 = vld [vmem:[%s5 + $0x10] sm:$0xff]
    %v243 = vld [vmem:[%s5 + $0x18] sm:$0xff]
    %v244 = vld [vmem:[%s5 + $0x20] sm:$0xff]
    %v245 = vld [vmem:[%s5 + $0x28] sm:$0xff]
    %v246 = vld [vmem:[%s5 + $0x30] sm:$0xff]
    %v247 = vld [vmem:[%s5 + $0x38] sm:$0xff]
    %vm248 = vcmask 523264
    %v250 = vsel %vm248, %v236, 0
    %v253 = vsel %vm248, %v237, 0
    %255 = vmatprep.subr.mxu0 0.0
    %256 = vmatpush1.msra.mxu0 0.0
    %257 = vmatprep.subr.mxu0 0.0
    %258 = vmatpush1.msra.mxu0 0.0
    %259 = vmatprep.subr.mxu0 0.0
    %260 = vmatpush1.msra.mxu0 0.0
    %261 = vmatprep.subr.mxu0 0.0
    %262 = vmatpush1.msra.mxu0 0.0
    %263 = vmatprep.subr.mxu0 0.0
    %264 = vmatpush1.msra.mxu0 0.0
    %265 = vmatprep.subr.mxu0 0.0
    %266 = vmatpush1.msra.mxu0 0.0
    %267 = vmatprep.subr.mxu0 0.0
    %268 = vmatpush1.msra.mxu0 0.0
    %269 = vmatprep.subr.mxu0 0.0
    %270 = vmatpush1.msra.mxu0 0.0
    %271 = vmatprep.subr.mxu0 0.0
    %272 = vmatpush1.msra.mxu0 %v247
    %273 = vmatprep.subr.mxu0 0.0
    %274 = vmatpush1.msra.mxu0 %v246
    %275 = vmatprep.subr.mxu0 0.0
    %276 = vmatpush1.msra.mxu0 %v245
    %277 = vmatprep.subr.mxu0 0.0
    %278 = vmatpush1.msra.mxu0 %v244
    %279 = vmatprep.subr.mxu0 0.0
    %280 = vmatpush1.msra.mxu0 %v243
    %281 = vmatprep.subr.mxu0 0.0
    %282 = vmatpush1.msra.mxu0 %v242
    %283 = vmatprep.subr.mxu0 0.0
    %284 = vmatpush1.msra.mxu0 %v241
    %285 = vmatprep.subr.mxu0 0.0
    %286 = vmatpush1.msra.mxu0 %v240
    %287 = vmatprep.subr.mxu0 0.0
    %288 = vmatpush2.msra.mxu0 0.0
    %289 = vmatprep.subr.mxu0 0.0
    %290 = vmatpush2.msra.mxu0 0.0
    %291 = vmatprep.subr.mxu0 0.0
    %292 = vmatpush2.msra.mxu0 0.0
    %293 = vmatprep.subr.mxu0 0.0
    %294 = vmatpush2.msra.mxu0 0.0
    %295 = vmatprep.subr.mxu0 0.0
    %296 = vmatpush2.msra.mxu0 0.0
    %297 = vmatprep.subr.mxu0 0.0
    %298 = vmatpush2.msra.mxu0 0.0
    %299 = vmatprep.subr.mxu0 0.0
    %300 = vmatpush2.msra.mxu0 0.0
    %301 = vmatprep.subr.mxu0 0.0
    %302 = vmatpush2.msra.mxu0 0.0
    %303 = vmatprep.subr.mxu0 0.0
    %304 = vmatpush2.msra.mxu0 0.0
    %305 = vmatprep.subr.mxu0 0.0
    %306 = vmatpush2.msra.mxu0 0.0
    %307 = vmatprep.subr.mxu0 0.0
    %308 = vmatpush2.msra.mxu0 0.0
    %309 = vmatprep.subr.mxu0 0.0
    %310 = vmatpush2.msra.mxu0 0.0
    %311 = vmatprep.subr.mxu0 0.0
    %312 = vmatpush2.msra.mxu0 0.0
    %313 = vmatprep.subr.mxu0 0.0
    %314 = vmatpush2.msra.mxu0 0.0
    %315 = vmatprep.subr.mxu0 0.0
    %316 = vmatpush2.msra.mxu0 0.0
    %317 = vmatprep.subr.mxu0 0.0
    %318 = vmatpush2.msra.mxu0 0.0
    %319 = vmatprep.mubr.f32.mxu0 0.0
    %320 = vmatmul.mubr.f32.gmra.mxu0 %v250
    %v321 = vpop.f32.mrf.mxu0
    %v322 = vadd.f32 0.0, %v321
    %v323 = vpop.f32.mrf.mxu0
    %324 = vmatprep.mubr.f32.mxu0 0.0
    %325 = vmatmul.mubr.f32.gmra.mxu0 %v253
    %v326 = vpop.f32.mrf.mxu0
    %v327 = vadd.f32 0.0, %v326
    %v328 = vpop.f32.mrf.mxu0
    %329 = vdwg.mxu0
    %v330 = vadd.f32 %v238, %v322
    %v331 = vadd.f32 %v239, %v327
    %332 = vst.msk [vmem:[#allocation2] sm:$0xff] %vm54, %v330
    %333 = vst.msk [vmem:[#allocation2 + $0x8] sm:$0xff] %vm54, %v331
    // Predicated region
    $region34: #{tpu_custom_call.1} parent=1 // pred_check
      %p334 = pneg %p27
    $region35: #{tpu_custom_call.1} parent=1 // pred_check_branch
      %336 = sbr.rel (%p334) target = $region37
    $region36: #{tpu_custom_call.1} parent=1 // pred_region
      %v337 = vld [vmem:[#allocation2] sm:$0xff]
      %v338 = vld [vmem:[#allocation2 + $0x8] sm:$0xff]
      %339 = vst.msk [vmem:[#allocation3] sm:$0xff] %vm54, %v337
      %340 = vst.msk [vmem:[#allocation3 + $0x8] sm:$0xff] %vm54, %v338
    $region37: #{tpu_custom_call.1} parent=1 // pred_fallthru
      _
    // Predicated region
    $region38: #{tpu_custom_call.1} parent=1 // pred_check
      _
    $region39: #{tpu_custom_call.1} parent=1 // pred_check_branch
      %342 = sbr.rel (0) target = $region41
    $region40: #{tpu_custom_call.1} parent=1 // pred_region
      %s344 = ssub.s32 256, 256
      %345 = vsyncadd [#allocation4], %s344
      %s346 = sshll.u32 [#allocation3], 4
      %s347 = int_to_ptr.vmem [resolvable:$true] %s346
      %352 = dma.vmem_to_hbm [thread:$0]  %s347, 256, %s7, [#allocation4], 128, 128, 8
    $region41: #{tpu_custom_call.1} parent=1 // pred_fallthru
      _
    // Predicated region
    $region42: #{tpu_custom_call.1} parent=1 // pred_check
      _
    $region43: #{tpu_custom_call.1} parent=1 // pred_check_branch
      %354 = sbr.rel (0) target = $region45
    $region44: #{tpu_custom_call.1} parent=1 // pred_region
      %355 = dma.done [#allocation4], 256
    $region45: #{tpu_custom_call.1} parent=1 // pred_fallthru
      _
    %356 = vsyncpa [#allocation4], 1

</llo_original>
